<compile_context>
chip_gen: v7x
topology: tpu7x:2x2x1
jax: 0.10.0
libtpu: 0.0.40
codegen_flags: <defaults>
</compile_context>

<pallas_src>
import functools

import jax
import jax.numpy as jnp
from jax.experimental import pallas as pl
from jax.experimental.pallas import tpu as pltpu


# ----------------------------------------------------------------------------
# Kernel
# ----------------------------------------------------------------------------
def _mlp_kernel(x_ref, w1_ref, b1_ref, w2_ref, b2_ref, o_ref):
    x = x_ref[...]
    if x.dtype != jnp.bfloat16:            # trace-time dtype dispatch
        x = x.astype(jnp.bfloat16)
    # fc1 on the MXU, f32 accumulation.
    h = jnp.dot(x, w1_ref[...], preferred_element_type=jnp.float32)
    # bias + ReLU on the VPU (f32).
    h = jnp.maximum(h + b1_ref[...], 0.0)
    # fc2: bf16 operands, f32 accumulation on the MXU.
    y = jnp.dot(h.astype(jnp.bfloat16), w2_ref[...],
                preferred_element_type=jnp.float32)
    y = y + b2_ref[...]
    # Sigmoid on the EUP; lane-dense bf16 store of the padded output tile.
    o_ref[...] = jax.nn.sigmoid(y).astype(o_ref.dtype)


# ----------------------------------------------------------------------------
# One-time parameter preparation (off the hot path)
# ----------------------------------------------------------------------------
def prepare_params(w1, b1, w2, b2):
    """Call once and reuse: bf16 weights, fc2 weight/bias zero-padded to a
    128-lane multiple, biases reshaped to (1, n) f32.

    w1: (input_dim, hidden_dim), w2: (hidden_dim, output_dim) -- the PyTorch
    nn.Linear weights already transposed to (in, out)."""
    input_dim, hidden_dim = w1.shape
    output_dim = w2.shape[1]
    padded_out = max(128, ((output_dim + 127) // 128) * 128)

    w1_bf = jnp.asarray(w1, jnp.bfloat16)
    w2_bf = jnp.zeros((hidden_dim, padded_out), jnp.bfloat16)
    w2_bf = w2_bf.at[:, :output_dim].set(jnp.asarray(w2, jnp.bfloat16))
    b1_2d = jnp.asarray(b1, jnp.float32).reshape(1, hidden_dim)
    b2_2d = jnp.zeros((1, padded_out), jnp.float32)
    b2_2d = b2_2d.at[0, :output_dim].set(jnp.asarray(b2, jnp.float32))
    return {"w1": w1_bf, "b1": b1_2d, "w2": w2_bf, "b2": b2_2d,
            "output_dim": output_dim}


# ----------------------------------------------------------------------------
# Generation-aware batch tiling
# ----------------------------------------------------------------------------
@functools.lru_cache(maxsize=1)
def _num_tensorcores():
    """v7x exposes 2 TensorCores per chip; v5e/v6e expose 1."""
    try:
        kind = jax.devices()[0].device_kind.lower()
    except Exception:
        return 1
    if "v7" in kind or "7x" in kind:
        return 2
    return 1


_VMEM_BUDGET_BYTES = 24 * 1024 * 1024  # headroom under v7x's 32 MiB scoped default


def _vmem_footprint_bytes(bb, input_dim, hidden_dim, padded_out, x_itemsize):
    # BlockSpec double-buffers every operand (weights too, despite the
    # constant index map).
    x_bytes = 2 * bb * input_dim * x_itemsize
    out_bytes = 2 * bb * padded_out * 2                                   # bf16
    w_bytes = 2 * (input_dim * hidden_dim + hidden_dim * padded_out) * 2  # bf16
    b_bytes = 2 * (hidden_dim + padded_out) * 4                           # f32
    return x_bytes + out_bytes + w_bytes + b_bytes


def _pick_block_b(B, input_dim, hidden_dim, padded_out, x_itemsize,
                  num_tc, max_block_b):
    if B <= 8:
        return B  # full-extent block is always legal
    if num_tc <= 1:
        # v5e / v6e: one TensorCore -> splitting the grid buys nothing and
        # costs per-step overhead; take the largest tile.
        bb = min(B, max_block_b)
    else:
        # v7x: 2 TensorCores -> aim for >= 2 grid steps per core so each core
        # hides its x-tile DMA / output writeback behind compute.
        bb = min(max_block_b, max(8, B // (2 * num_tc)))
    if bb != B:
        bb = max(8, (bb // 8) * 8)  # sublane-aligned
    # VMEM guardrail (relevant only on v7x's smaller VMEM; never binds here).
    while (bb > 8 and bb != B and
           _vmem_footprint_bytes(bb, input_dim, hidden_dim, padded_out,
                                 x_itemsize) > _VMEM_BUDGET_BYTES):
        bb = max(8, (bb // 2 // 8) * 8)
    return bb


# ----------------------------------------------------------------------------
# Forward
# ----------------------------------------------------------------------------
@functools.partial(jax.jit,
                   static_argnames=("output_dim", "block_b", "slice_output"))
def _mlp_forward(x, w1_bf, b1_2d, w2_bf, b2_2d, *,
                 output_dim, block_b, slice_output):
    B, input_dim = x.shape
    hidden_dim = w1_bf.shape[1]
    padded_out = w2_bf.shape[1]
    grid = (pl.cdiv(B, block_b),)

    cost = pl.CostEstimate(
        flops=2 * B * (input_dim * hidden_dim + hidden_dim * padded_out),
        transcendentals=B * padded_out,                            # sigmoid
        bytes_accessed=(B * input_dim * x.dtype.itemsize           # x read
                        + (input_dim * hidden_dim
                           + hidden_dim * padded_out) * 2          # bf16 weights
                        + (hidden_dim + padded_out) * 4            # f32 biases
                        + B * padded_out * 2))                     # bf16 writeback

    out_padded = pl.pallas_call(
        _mlp_kernel,
        out_shape=jax.ShapeDtypeStruct((B, padded_out), jnp.bfloat16),
        grid_spec=pltpu.PrefetchScalarGridSpec(
            num_scalar_prefetch=0,
            grid=grid,
            in_specs=[
                # x: tiled over batch only (last dim = full array dim -> legal).
                pl.BlockSpec((block_b, input_dim), lambda i: (i, 0)),
                # weights / biases: constant index maps -> VMEM-resident
                # across the whole grid, no re-DMA.
                pl.BlockSpec((input_dim, hidden_dim), lambda i: (0, 0)),
                pl.BlockSpec((1, hidden_dim), lambda i: (0, 0)),
                pl.BlockSpec((hidden_dim, padded_out), lambda i: (0, 0)),
                pl.BlockSpec((1, padded_out), lambda i: (0, 0)),
            ],
            out_specs=pl.BlockSpec((block_b, padded_out), lambda i: (i, 0)),
        ),
        compiler_params=pltpu.CompilerParams(
            dimension_semantics=("parallel",)),
        cost_estimate=cost,
    )(x, w1_bf, b1_2d, w2_bf, b2_2d)

    if slice_output:
        return out_padded[:, :output_dim]
    # Padded columns hold sigmoid(0) = 0.5; don't reduce over the last axis
    # of the padded buffer without masking.
    return out_padded


def three_layer_mlp(x, params, *, slice_output=True, max_block_b=512):
    """sigmoid(relu(x @ w1 + b1) @ w2 + b2), bf16 output.

    `params` comes from prepare_params() (call once, reuse every step).
    slice_output=False returns the 128-lane-padded buffer so a downstream
    consumer can fuse/avoid the extra slice pass."""
    B, input_dim = x.shape
    hidden_dim = params["w1"].shape[1]
    padded_out = params["w2"].shape[1]
    bb = _pick_block_b(B, input_dim, hidden_dim, padded_out,
                       jnp.dtype(x.dtype).itemsize,
                       _num_tensorcores(), max_block_b)
    return _mlp_forward(x, params["w1"], params["b1"],
                        params["w2"], params["b2"],
                        output_dim=params["output_dim"],
                        block_b=bb, slice_output=slice_output)


# ----------------------------------------------------------------------------
# Self-test
# ----------------------------------------------------------------------------
if __name__ == "__main__":
    # Module defaults: input_dim=320, output_dim=6, hidden_dim=160.
    # TODO(synk): hidden_dim=160 / input_dim=320 waste MXU lanes on v5e's
    # 128-wide MXU (layer-1 ~40-60% waste); a shape-level fix (hidden 128/256)
    # is outside this kernel's control.
    input_dim, hidden_dim, output_dim = 320, 160, 6
    batch = 64

    key = jax.random.PRNGKey(0)
    kx, kw1, kb1, kw2, kb2 = jax.random.split(key, 5)

    x = jax.random.normal(kx, (batch, input_dim), dtype=jnp.float32)

    # Deterministic init mimicking nn.Linear's U(-1/sqrt(fan_in), 1/sqrt(fan_in)).
    lim1 = 1.0 / (input_dim ** 0.5)
    lim2 = 1.0 / (hidden_dim ** 0.5)
    # Stored pre-transposed: (in_features, out_features).
    w1 = jax.random.uniform(kw1, (input_dim, hidden_dim), jnp.float32, -lim1, lim1)
    b1 = jax.random.uniform(kb1, (hidden_dim,), jnp.float32, -lim1, lim1)
    w2 = jax.random.uniform(kw2, (hidden_dim, output_dim), jnp.float32, -lim2, lim2)
    b2 = jax.random.uniform(kb2, (output_dim,), jnp.float32, -lim2, lim2)

    params = prepare_params(w1, b1, w2, b2)   # one-time, off the hot path

    out = three_layer_mlp(x, params)
    out = jax.block_until_ready(out)

    ref = jax.nn.sigmoid(jnp.maximum(x @ w1 + b1, 0.0) @ w2 + b2)
    assert out.shape == (batch, output_dim), out.shape
    # bf16 matmul operands + bf16 output; sigmoid output lies in [0, 1], so an
    # absolute tolerance of 2e-2 comfortably bounds the rounding.
    assert jnp.allclose(out.astype(jnp.float32), ref, atol=2e-2, rtol=0.0), \
        "mismatch vs reference"

    print("KERNEL_OK")
</pallas_src>

<mosaic_0001>
module attributes {stable_mosaic.version = 11 : i64} {
  func.func @_mlp_kernel(%arg0: i32, %arg1: memref<64x320xf32, #tpu.memory_space<vmem>>, %arg2: memref<320x160xbf16, #tpu.memory_space<vmem>>, %arg3: memref<1x160xf32, #tpu.memory_space<vmem>>, %arg4: memref<160x128xbf16, #tpu.memory_space<vmem>>, %arg5: memref<1x128xf32, #tpu.memory_space<vmem>>, %arg6: memref<64x128xbf16, #tpu.memory_space<vmem>>) attributes {dimension_semantics = [#tpu.dimension_semantics<parallel>], iteration_bounds = array<i64: 1>, scalar_prefetch = 0 : i64, scratch_operands = 0 : i64, tpu.core_type = #tpu.core_type<tc>, window_params = [{transform_indices = @transform_0, window_bounds = array<i64: 64, 320>}, {pipeline_mode = #tpu.pipeline_mode<synchronous>, transform_indices = @transform_1, window_bounds = array<i64: 320, 160>}, {pipeline_mode = #tpu.pipeline_mode<synchronous>, transform_indices = @transform_2, window_bounds = array<i64: 1, 160>}, {pipeline_mode = #tpu.pipeline_mode<synchronous>, transform_indices = @transform_3, window_bounds = array<i64: 160, 128>}, {pipeline_mode = #tpu.pipeline_mode<synchronous>, transform_indices = @transform_4, window_bounds = array<i64: 1, 128>}, {transform_indices = @transform_5, window_bounds = array<i64: 64, 128>}]} {
    %c0 = arith.constant 0 : index
    %c0_0 = arith.constant 0 : index
    %0 = vector.load %arg1[%c0, %c0_0] : memref<64x320xf32, #tpu.memory_space<vmem>>, vector<64x320xf32>
    %1 = arith.truncf %0 : vector<64x320xf32> to vector<64x320xbf16>
    %c0_1 = arith.constant 0 : index
    %c0_2 = arith.constant 0 : index
    %2 = vector.load %arg2[%c0_1, %c0_2] : memref<320x160xbf16, #tpu.memory_space<vmem>>, vector<320x160xbf16>
    %cst = arith.constant dense<0.000000e+00> : vector<64x160xf32>
    %3 = tpu.matmul %1, %2, %cst {dimension_numbers = #tpu.dot_dimension_numbers<[1], [0], [0], [1], [0, 0, 1, 1], [], []>} : vector<64x320xbf16>, vector<320x160xbf16>, vector<64x160xf32> -> vector<64x160xf32>
    %c0_3 = arith.constant 0 : index
    %c0_4 = arith.constant 0 : index
    %4 = vector.load %arg3[%c0_3, %c0_4] : memref<1x160xf32, #tpu.memory_space<vmem>>, vector<1x160xf32>
    %5 = vector.broadcast %4 : vector<1x160xf32> to vector<64x160xf32>
    %6 = arith.addf %3, %5 : vector<64x160xf32>
    %cst_5 = arith.constant 0.000000e+00 : f32
    %7 = vector.broadcast %cst_5 : f32 to vector<64x160xf32>
    %8 = arith.maximumf %6, %7 : vector<64x160xf32>
    %9 = arith.truncf %8 : vector<64x160xf32> to vector<64x160xbf16>
    %c0_6 = arith.constant 0 : index
    %c0_7 = arith.constant 0 : index
    %10 = vector.load %arg4[%c0_6, %c0_7] : memref<160x128xbf16, #tpu.memory_space<vmem>>, vector<160x128xbf16>
    %cst_8 = arith.constant dense<0.000000e+00> : vector<64x128xf32>
    %11 = tpu.matmul %9, %10, %cst_8 {dimension_numbers = #tpu.dot_dimension_numbers<[1], [0], [0], [1], [0, 0, 1, 1], [], []>} : vector<64x160xbf16>, vector<160x128xbf16>, vector<64x128xf32> -> vector<64x128xf32>
    %c0_9 = arith.constant 0 : index
    %c0_10 = arith.constant 0 : index
    %12 = vector.load %arg5[%c0_9, %c0_10] : memref<1x128xf32, #tpu.memory_space<vmem>>, vector<1x128xf32>
    %13 = vector.broadcast %12 : vector<1x128xf32> to vector<64x128xf32>
    %14 = arith.addf %11, %13 : vector<64x128xf32>
    %15 = arith.negf %14 : vector<64x128xf32>
    %16 = math.exp %15 : vector<64x128xf32>
    %cst_11 = arith.constant 1.000000e+00 : f32
    %17 = vector.broadcast %cst_11 : f32 to vector<64x128xf32>
    %18 = arith.addf %17, %16 : vector<64x128xf32>
    %19 = arith.divf %17, %18 : vector<64x128xf32>
    %20 = arith.truncf %19 : vector<64x128xf32> to vector<64x128xbf16>
    %c0_12 = arith.constant 0 : index
    %c0_13 = arith.constant 0 : index
    %21 = vector.load %arg6[%c0_12, %c0_13] : memref<64x128xbf16, #tpu.memory_space<vmem>>, vector<64x128xbf16>
    tpu.vector_store %arg6[%c0_12, %c0_13], %20 {strides = array<i32>} : memref<64x128xbf16, #tpu.memory_space<vmem>>, vector<64x128xbf16>,
    return
  }
  func.func @transform_0(%arg0: i32) -> (i32, i32) {
    %c0_i32 = arith.constant 0 : i32
    %c0_i32_0 = arith.constant 0 : i32
    return %arg0, %c0_i32 : i32, i32
  }
  func.func @transform_1(%arg0: i32) -> (i32, i32) {
    %c0_i32 = arith.constant 0 : i32
    %c0_i32_0 = arith.constant 0 : i32
    %c0_i32_1 = arith.constant 0 : i32
    return %c0_i32, %c0_i32_0 : i32, i32
  }
  func.func @transform_2(%arg0: i32) -> (i32, i32) {
    %c0_i32 = arith.constant 0 : i32
    %c0_i32_0 = arith.constant 0 : i32
    %c0_i32_1 = arith.constant 0 : i32
    return %c0_i32, %c0_i32_0 : i32, i32
  }
  func.func @transform_3(%arg0: i32) -> (i32, i32) {
    %c0_i32 = arith.constant 0 : i32
    %c0_i32_0 = arith.constant 0 : i32
    %c0_i32_1 = arith.constant 0 : i32
    return %c0_i32, %c0_i32_0 : i32, i32
  }
  func.func @transform_4(%arg0: i32) -> (i32, i32) {
    %c0_i32 = arith.constant 0 : i32
    %c0_i32_0 = arith.constant 0 : i32
    %c0_i32_1 = arith.constant 0 : i32
    return %c0_i32, %c0_i32_0 : i32, i32
  }
  func.func @transform_5(%arg0: i32) -> (i32, i32) {
    %c0_i32 = arith.constant 0 : i32
    %c0_i32_0 = arith.constant 0 : i32
    return %arg0, %c0_i32 : i32, i32
  }
}

</mosaic_0001>

<llo_original>
// kernel: _mlp_forward.1
$region0: #{_mlp_forward.1}
  #allocation0 [shape = 'u32[]', space=smem, size = 0x4, offset = 0x4, fixed_abs, tag = 'smem constant byte address 0x4 - core index']
  #allocation1 [shape = 'u32[144,128]{1,0:T(1,128)}', space=vmem, size = 0x12000, scoped, tag = 'internal scratch']
  %s0 = inlined_call_operand.vmem [shape: f32[64,320], index: 0, kind: input, shape index: {}]
  %s1 = inlined_call_operand.vmem [shape: bf16[320,160], index: 1, kind: input, shape index: {}]
  %s2 = inlined_call_operand.vmem [shape: f32[1,160], index: 2, kind: input, shape index: {}]
  %s3 = inlined_call_operand.vmem [shape: bf16[160,128], index: 3, kind: input, shape index: {}]
  %s4 = inlined_call_operand.vmem [shape: f32[1,128], index: 4, kind: input, shape index: {}]
  %s5 = inlined_call_operand.vmem [shape: bf16[64,128], index: 5, kind: output, shape index: {}]
  %s6 = sld [smem:[#allocation0]]
  $region30: #{_mlp_forward.1} parent=0
    _
  %s8 = ssub.s32 1, %s6
  %s9 = scalar_select 0, %s8, %s6
  // Predicated region
  $region2: #{_mlp_forward.1} parent=0 // pred_check
    _
  $region3: #{_mlp_forward.1} parent=0 // pred_check_branch
    %11 = sbr.rel (0) target = $region5
  $region4: #{_mlp_forward.1} parent=0 // pred_region
    _
  $region5: #{_mlp_forward.1} parent=0 // pred_fallthru
    _
  // Predicated region
  $region6: #{_mlp_forward.1} parent=0 // pred_check
    _
  $region7: #{_mlp_forward.1} parent=0 // pred_check_branch
    %13 = sbr.rel (0) target = $region9
  $region8: #{_mlp_forward.1} parent=0 // pred_region
    _
  $region9: #{_mlp_forward.1} parent=0 // pred_fallthru
    _
  // Predicated region
  $region10: #{_mlp_forward.1} parent=0 // pred_check
    _
  $region11: #{_mlp_forward.1} parent=0 // pred_check_branch
    %15 = sbr.rel (0) target = $region13
  $region12: #{_mlp_forward.1} parent=0 // pred_region
    _
  $region13: #{_mlp_forward.1} parent=0 // pred_fallthru
    _
  // Predicated region
  $region14: #{_mlp_forward.1} parent=0 // pred_check
    _
  $region15: #{_mlp_forward.1} parent=0 // pred_check_branch
    %17 = sbr.rel (0) target = $region17
  $region16: #{_mlp_forward.1} parent=0 // pred_region
    _
  $region17: #{_mlp_forward.1} parent=0 // pred_fallthru
    _
  // Predicated region
  $region18: #{_mlp_forward.1} parent=0 // pred_check
    _
  $region19: #{_mlp_forward.1} parent=0 // pred_check_branch
    %19 = sbr.rel (0) target = $region21
  $region20: #{_mlp_forward.1} parent=0 // pred_region
    _
  $region21: #{_mlp_forward.1} parent=0 // pred_fallthru
    _
  %v21 = vld [vmem:[%s0] sm:$0xff]
  %v22 = vld [vmem:[%s0 + $0x8] sm:$0xff]
  %v23 = vld [vmem:[%s0 + $0x10] sm:$0xff]
  %v24 = vld [vmem:[%s0 + $0x18] sm:$0xff]
  %v25 = vld [vmem:[%s0 + $0x20] sm:$0xff]
  %v26 = vld [vmem:[%s0 + $0x28] sm:$0xff]
  %v27 = vld [vmem:[%s0 + $0x30] sm:$0xff]
  %v28 = vld [vmem:[%s0 + $0x38] sm:$0xff]
  %v29 = vld [vmem:[%s0 + $0x40] sm:$0xff]
  %v30 = vld [vmem:[%s0 + $0x48] sm:$0xff]
  %v31 = vld [vmem:[%s0 + $0x50] sm:$0xff]
  %v32 = vld [vmem:[%s0 + $0x58] sm:$0xff]
  %v33 = vld [vmem:[%s0 + $0x60] sm:$0xff]
  %v34 = vld [vmem:[%s0 + $0x68] sm:$0xff]
  %v35 = vld [vmem:[%s0 + $0x70] sm:$0xff]
  %v36 = vld [vmem:[%s0 + $0x78] sm:$0xff]
  %v37 = vld [vmem:[%s0 + $0x80] sm:$0xff]
  %v38 = vld [vmem:[%s0 + $0x88] sm:$0xff]
  %v39 = vld [vmem:[%s0 + $0x90] sm:$0xff]
  %v40 = vld [vmem:[%s0 + $0x98] sm:$0xff]
  %v41 = vld [vmem:[%s0 + $0xa0] sm:$0xff]
  %v42 = vld [vmem:[%s0 + $0xa8] sm:$0xff]
  %v43 = vld [vmem:[%s0 + $0xb0] sm:$0xff]
  %v44 = vld [vmem:[%s0 + $0xb8] sm:$0xff]
  %v45 = vpack.c.bf16 %v24, %v21
  %v46 = vpack.c.bf16 %v25, %v22
  %v47 = vpack.c.bf16 %v26, %v23
  %v48 = vpack.c.bf16 %v30, %v27
  %v49 = vpack.c.bf16 %v31, %v28
  %v50 = vpack.c.bf16 %v32, %v29
  %v51 = vpack.c.bf16 %v36, %v33
  %v52 = vpack.c.bf16 %v37, %v34
  %v53 = vpack.c.bf16 %v38, %v35
  %v54 = vpack.c.bf16 %v42, %v39
  %v55 = vpack.c.bf16 %v43, %v40
  %v56 = vpack.c.bf16 %v44, %v41
  %v57 = vld [vmem:[%s1] sm:$0xff]
  %v58 = vld [vmem:[%s1 + $0x8] sm:$0xff]
  %v59 = vld [vmem:[%s1 + $0x10] sm:$0xff]
  %v60 = vld [vmem:[%s1 + $0x18] sm:$0xff]
  %v61 = vld [vmem:[%s1 + $0x20] sm:$0xff]
  %v62 = vld [vmem:[%s1 + $0x28] sm:$0xff]
  %v63 = vld [vmem:[%s1 + $0x30] sm:$0xff]
  %v64 = vld [vmem:[%s1 + $0x38] sm:$0xff]
  %v65 = vld [vmem:[%s1 + $0x40] sm:$0xff]
  %v66 = vld [vmem:[%s1 + $0x48] sm:$0xff]
  %v67 = vld [vmem:[%s1 + $0x50] sm:$0xff]
  %v68 = vld [vmem:[%s1 + $0x58] sm:$0xff]
  %v69 = vld [vmem:[%s1 + $0x60] sm:$0xff]
  %v70 = vld [vmem:[%s1 + $0x68] sm:$0xff]
  %v71 = vld [vmem:[%s1 + $0x70] sm:$0xff]
  %v72 = vld [vmem:[%s1 + $0x78] sm:$0xff]
  %v73 = vld [vmem:[%s1 + $0x80] sm:$0xff]
  %v74 = vld [vmem:[%s1 + $0x88] sm:$0xff]
  %v75 = vld [vmem:[%s1 + $0x90] sm:$0xff]
  %v76 = vld [vmem:[%s1 + $0x98] sm:$0xff]
  %v77 = vld [vmem:[%s1 + $0xa0] sm:$0xff]
  %v78 = vld [vmem:[%s1 + $0xa8] sm:$0xff]
  %v79 = vld [vmem:[%s1 + $0xb0] sm:$0xff]
  %v80 = vld [vmem:[%s1 + $0xb8] sm:$0xff]
  %v81 = vld [vmem:[%s1 + $0xc0] sm:$0xff]
  %v82 = vld [vmem:[%s1 + $0xc8] sm:$0xff]
  %v83 = vld [vmem:[%s1 + $0xd0] sm:$0xff]
  %v84 = vld [vmem:[%s1 + $0xd8] sm:$0xff]
  %v85 = vld [vmem:[%s1 + $0xe0] sm:$0xff]
  %v86 = vld [vmem:[%s1 + $0xe8] sm:$0xff]
  %v87 = vld [vmem:[%s1 + $0xf0] sm:$0xff]
  %v88 = vld [vmem:[%s1 + $0xf8] sm:$0xff]
  %v89 = vld [vmem:[%s1 + $0x100] sm:$0xff]
  %v90 = vld [vmem:[%s1 + $0x108] sm:$0xff]
  %v91 = vld [vmem:[%s1 + $0x110] sm:$0xff]
  %v92 = vld [vmem:[%s1 + $0x118] sm:$0xff]
  %v93 = vld [vmem:[%s1 + $0x120] sm:$0xff]
  %v94 = vld [vmem:[%s1 + $0x128] sm:$0xff]
  %v95 = vld [vmem:[%s1 + $0x130] sm:$0xff]
  %v96 = vld [vmem:[%s1 + $0x138] sm:$0xff]
  %v97 = vld [vmem:[%s2] sm:$0x3]
  %v99 = vlaneseq
  %v100 = vshrl.u32 %v99, 7
  %v101 = vsub.s32 0, %v100
  %v102 = vrot.slane %v97, %v101
  %v103 = vlaneseq
  %v104 = vshrl.u32 %v103, 7
  %v105 = vsub.s32 1, %v104
  %v106 = vrot.slane %v97, %v105
  %v149 = vunpack.c.l.b16 %v57
  %v150 = vunpack.c.h.b16 %v57
  %v151 = vunpack.c.l.b16 %v58
  %v152 = vunpack.c.h.b16 %v58
  %v153 = vunpack.c.l.b16 %v59
  %v154 = vunpack.c.h.b16 %v59
  %v155 = vunpack.c.l.b16 %v60
  %v156 = vunpack.c.h.b16 %v60
  %v157 = vunpack.c.l.b16 %v61
  %v158 = vunpack.c.h.b16 %v61
  %v159 = vunpack.c.l.b16 %v62
  %v160 = vunpack.c.h.b16 %v62
  %v161 = vunpack.c.l.b16 %v63
  %v162 = vunpack.c.h.b16 %v63
  %v163 = vunpack.c.l.b16 %v64
  %v164 = vunpack.c.h.b16 %v64
  %v165 = vunpack.c.l.b16 %v65
  %v166 = vunpack.c.h.b16 %v65
  %v167 = vunpack.c.l.b16 %v66
  %v168 = vunpack.c.h.b16 %v66
  %v169 = vunpack.c.l.b16 %v67
  %v170 = vunpack.c.h.b16 %v67
  %v171 = vunpack.c.l.b16 %v68
  %v172 = vunpack.c.h.b16 %v68
  %v173 = vunpack.c.l.b16 %v69
  %v174 = vunpack.c.h.b16 %v69
  %v175 = vunpack.c.l.b16 %v70
  %v176 = vunpack.c.h.b16 %v70
  %v177 = vunpack.c.l.b16 %v71
  %v178 = vunpack.c.h.b16 %v71
  %v179 = vunpack.c.l.b16 %v72
  %v180 = vunpack.c.h.b16 %v72
  %v181 = vunpack.c.l.b16 %v73
  %v182 = vunpack.c.h.b16 %v73
  %v183 = vunpack.c.l.b16 %v74
  %v184 = vunpack.c.h.b16 %v74
  %v185 = vunpack.c.l.b16 %v75
  %v186 = vunpack.c.h.b16 %v75
  %v187 = vunpack.c.l.b16 %v76
  %v188 = vunpack.c.h.b16 %v76
  %v189 = vunpack.c.l.b16 %v77
  %v190 = vunpack.c.h.b16 %v77
  %v191 = vunpack.c.l.b16 %v78
  %v192 = vunpack.c.h.b16 %v78
  %v193 = vunpack.c.l.b16 %v79
  %v194 = vunpack.c.h.b16 %v79
  %v195 = vunpack.c.l.b16 %v80
  %v196 = vunpack.c.h.b16 %v80
  %v197 = vunpack.c.l.b16 %v81
  %v198 = vunpack.c.h.b16 %v81
  %v199 = vunpack.c.l.b16 %v82
  %v200 = vunpack.c.h.b16 %v82
  %v201 = vunpack.c.l.b16 %v83
  %v202 = vunpack.c.h.b16 %v83
  %v203 = vunpack.c.l.b16 %v84
  %v204 = vunpack.c.h.b16 %v84
  %v205 = vunpack.c.l.b16 %v85
  %v206 = vunpack.c.h.b16 %v85
  %v207 = vunpack.c.l.b16 %v86
  %v208 = vunpack.c.h.b16 %v86
  %v209 = vunpack.c.l.b16 %v87
  %v210 = vunpack.c.h.b16 %v87
  %v211 = vunpack.c.l.b16 %v88
  %v212 = vunpack.c.h.b16 %v88
  %v213 = vunpack.c.l.b16 %v89
  %v214 = vunpack.c.h.b16 %v89
  %v215 = vunpack.c.l.b16 %v90
  %v216 = vunpack.c.h.b16 %v90
  %v217 = vunpack.c.l.b16 %v91
  %v218 = vunpack.c.h.b16 %v91
  %v219 = vunpack.c.l.b16 %v92
  %v220 = vunpack.c.h.b16 %v92
  %v221 = vunpack.c.l.b16 %v93
  %v222 = vunpack.c.h.b16 %v93
  %v223 = vunpack.c.l.b16 %v94
  %v224 = vunpack.c.h.b16 %v94
  %v225 = vunpack.c.l.b16 %v95
  %v226 = vunpack.c.h.b16 %v95
  %v227 = vunpack.c.l.b16 %v96
  %v228 = vunpack.c.h.b16 %v96
  %v229 = vpack.c.b16 %v151, %v149
  %v230 = vpack.c.b16 %v152, %v150
  %v231 = vpack.c.b16 %v155, %v153
  %v232 = vpack.c.b16 %v156, %v154
  %v233 = vpack.c.b16 %v159, %v157
  %v234 = vpack.c.b16 %v160, %v158
  %v235 = vpack.c.b16 %v163, %v161
  %v236 = vpack.c.b16 %v164, %v162
  %v237 = vpack.c.b16 %v167, %v165
  %v238 = vpack.c.b16 %v168, %v166
  %v239 = vpack.c.b16 %v171, %v169
  %v240 = vpack.c.b16 %v172, %v170
  %v241 = vpack.c.b16 %v175, %v173
  %v242 = vpack.c.b16 %v176, %v174
  %v243 = vpack.c.b16 %v179, %v177
  %v244 = vpack.c.b16 %v180, %v178
  %v245 = vpack.c.b16 %v183, %v181
  %v246 = vpack.c.b16 %v184, %v182
  %v247 = vpack.c.b16 %v187, %v185
  %v248 = vpack.c.b16 %v188, %v186
  %v249 = vpack.c.b16 %v191, %v189
  %v250 = vpack.c.b16 %v192, %v190
  %v251 = vpack.c.b16 %v195, %v193
  %v252 = vpack.c.b16 %v196, %v194
  %v253 = vpack.c.b16 %v199, %v197
  %v254 = vpack.c.b16 %v200, %v198
  %v255 = vpack.c.b16 %v203, %v201
  %v256 = vpack.c.b16 %v204, %v202
  %v257 = vpack.c.b16 %v207, %v205
  %v258 = vpack.c.b16 %v208, %v206
  %v259 = vpack.c.b16 %v211, %v209
  %v260 = vpack.c.b16 %v212, %v210
  %v261 = vpack.c.b16 %v215, %v213
  %v262 = vpack.c.b16 %v216, %v214
  %v263 = vpack.c.b16 %v219, %v217
  %v264 = vpack.c.b16 %v220, %v218
  %v265 = vpack.c.b16 %v223, %v221
  %v266 = vpack.c.b16 %v224, %v222
  %v267 = vpack.c.b16 %v227, %v225
  %v268 = vpack.c.b16 %v228, %v226
  %vm309 = vcmask 523264
  %v311 = vsel %vm309, %v47, 0
  %v314 = vsel %vm309, %v50, 0
  %v317 = vsel %vm309, %v53, 0
  %v320 = vsel %vm309, %v56, 0
  %322 = vmatprep.subr.bf16.mxu0 %v230
  %323 = vmatpush1.bf16.msra.mxu0 %v229
  %324 = vmatprep.subr.bf16.mxu0 %v232
  %325 = vmatpush1.bf16.msra.mxu0 %v231
  %326 = vmatprep.subr.bf16.mxu0 %v234
  %327 = vmatpush1.bf16.msra.mxu0 %v233
  %328 = vmatprep.subr.bf16.mxu0 %v236
  %329 = vmatpush1.bf16.msra.mxu0 %v235
  %330 = vmatprep.subr.bf16.mxu0 %v238
  %331 = vmatpush1.bf16.msra.mxu0 %v237
  %332 = vmatprep.subr.bf16.mxu0 %v240
  %333 = vmatpush1.bf16.msra.mxu0 %v239
  %334 = vmatprep.subr.bf16.mxu0 %v242
  %335 = vmatpush1.bf16.msra.mxu0 %v241
  %336 = vmatprep.subr.bf16.mxu0 %v244
  %337 = vmatpush1.bf16.msra.mxu0 %v243
  %338 = vmatprep.subr.bf16.mxu0 %v246
  %339 = vmatpush1.bf16.msra.mxu0 %v245
  %340 = vmatprep.subr.bf16.mxu0 %v248
  %341 = vmatpush1.bf16.msra.mxu0 %v247
  %342 = vmatprep.subr.bf16.mxu0 %v250
  %343 = vmatpush1.bf16.msra.mxu0 %v249
  %344 = vmatprep.subr.bf16.mxu0 %v252
  %345 = vmatpush1.bf16.msra.mxu0 %v251
  %346 = vmatprep.subr.bf16.mxu0 %v254
  %347 = vmatpush1.bf16.msra.mxu0 %v253
  %348 = vmatprep.subr.bf16.mxu0 %v256
  %349 = vmatpush1.bf16.msra.mxu0 %v255
  %350 = vmatprep.subr.bf16.mxu0 %v258
  %351 = vmatpush1.bf16.msra.mxu0 %v257
  %352 = vmatprep.subr.bf16.mxu0 %v260
  %353 = vmatpush1.bf16.msra.mxu0 %v259
  %354 = vmatprep.mubr.bf16.mxu0 %v46
  %355 = vmatmul.mubr.bf16.gmra.mrb[0].mxu0 %v45
  %v356 = vpop.f32.mrb[0].mxu0
  %v357 = vadd.f32 %v102, %v356
  %v358 = vpop.f32.mrb[0].mxu0
  %v359 = vadd.f32 %v106, %v358
  %v360 = vpop.f32.mrb[0].mxu0
  %v361 = vadd.f32 %v102, %v360
  %v362 = vpop.f32.mrb[0].mxu0
  %v363 = vadd.f32 %v106, %v362
  %364 = vmatprep.mubr.bf16.mxu0 %v49
  %365 = vmatmul.mubr.bf16.gmra.mrb[0].mxu0 %v48
  %v366 = vpop.f32.mrb[0].mxu0
  %v367 = vadd.f32 %v102, %v366
  %v368 = vpop.f32.mrb[0].mxu0
  %v369 = vadd.f32 %v106, %v368
  %v370 = vpop.f32.mrb[0].mxu0
  %v371 = vadd.f32 %v102, %v370
  %v372 = vpop.f32.mrb[0].mxu0
  %v373 = vadd.f32 %v106, %v372
  %374 = vmatprep.mubr.bf16.mxu0 %v52
  %375 = vmatmul.mubr.bf16.gmra.mrb[0].mxu0 %v51
  %v376 = vpop.f32.mrb[0].mxu0
  %v377 = vadd.f32 %v102, %v376
  %v378 = vpop.f32.mrb[0].mxu0
  %v379 = vadd.f32 %v106, %v378
  %v380 = vpop.f32.mrb[0].mxu0
  %v381 = vadd.f32 %v102, %v380
  %v382 = vpop.f32.mrb[0].mxu0
  %v383 = vadd.f32 %v106, %v382
  %384 = vmatprep.mubr.bf16.mxu0 %v55
  %385 = vmatmul.mubr.bf16.gmra.mrb[0].mxu0 %v54
  %v386 = vpop.f32.mrb[0].mxu0
  %v387 = vadd.f32 %v102, %v386
  %v388 = vpop.f32.mrb[0].mxu0
  %v389 = vadd.f32 %v106, %v388
  %v390 = vpop.f32.mrb[0].mxu0
  %v391 = vadd.f32 %v102, %v390
  %v392 = vpop.f32.mrb[0].mxu0
  %v393 = vadd.f32 %v106, %v392
  %394 = vdwg.mxu0
  %395 = vmatprep.subr.bf16.mxu0 %v262
  %396 = vmatpush1.bf16.msra.mxu0 %v261
  %397 = vmatprep.subr.bf16.mxu0 %v264
  %398 = vmatpush1.bf16.msra.mxu0 %v263
  %399 = vmatprep.subr.bf16.mxu0 %v266
  %400 = vmatpush1.bf16.msra.mxu0 %v265
  %401 = vmatprep.subr.bf16.mxu0 %v268
  %402 = vmatpush1.bf16.msra.mxu0 %v267
  %403 = vmatprep.subr.bf16.mxu0 0
  %404 = vmatpush1.bf16.msra.mxu0 0
  %405 = vmatprep.subr.bf16.mxu0 0
  %406 = vmatpush1.bf16.msra.mxu0 0
  %407 = vmatprep.subr.bf16.mxu0 0
  %408 = vmatpush1.bf16.msra.mxu0 0
  %409 = vmatprep.subr.bf16.mxu0 0
  %410 = vmatpush1.bf16.msra.mxu0 0
  %411 = vmatprep.subr.bf16.mxu0 0
  %412 = vmatpush1.bf16.msra.mxu0 0
  %413 = vmatprep.subr.bf16.mxu0 0
  %414 = vmatpush1.bf16.msra.mxu0 0
  %415 = vmatprep.subr.bf16.mxu0 0
  %416 = vmatpush1.bf16.msra.mxu0 0
  %417 = vmatprep.subr.bf16.mxu0 0
  %418 = vmatpush1.bf16.msra.mxu0 0
  %419 = vmatprep.subr.bf16.mxu0 0
  %420 = vmatpush1.bf16.msra.mxu0 0
  %421 = vmatprep.subr.bf16.mxu0 0
  %422 = vmatpush1.bf16.msra.mxu0 0
  %423 = vmatprep.subr.bf16.mxu0 0
  %424 = vmatpush1.bf16.msra.mxu0 0
  %425 = vmatprep.subr.bf16.mxu0 0
  %426 = vmatpush1.bf16.msra.mxu0 0
  %427 = vmatprep.mubr.bf16.mxu0 0
  %428 = vmatmul.mubr.bf16.gmra.mrb[0].mxu0 %v311
  %v429 = vpop.f32.mrb[0].mxu0
  %v430 = vadd.f32 %v357, %v429
  %v431 = vpop.f32.mrb[0].mxu0
  %v432 = vadd.f32 %v359, %v431
  %v433 = vpop.f32.mrb[0].mxu0
  %v434 = vadd.f32 %v361, %v433
  %v435 = vpop.f32.mrb[0].mxu0
  %v436 = vadd.f32 %v363, %v435
  %437 = vmatprep.mubr.bf16.mxu0 0
  %438 = vmatmul.mubr.bf16.gmra.mrb[0].mxu0 %v314
  %v439 = vpop.f32.mrb[0].mxu0
  %v440 = vadd.f32 %v367, %v439
  %v441 = vpop.f32.mrb[0].mxu0
  %v442 = vadd.f32 %v369, %v441
  %v443 = vpop.f32.mrb[0].mxu0
  %v444 = vadd.f32 %v371, %v443
  %v445 = vpop.f32.mrb[0].mxu0
  %v446 = vadd.f32 %v373, %v445
  %447 = vmatprep.mubr.bf16.mxu0 0
  %448 = vmatmul.mubr.bf16.gmra.mrb[0].mxu0 %v317
  %v449 = vpop.f32.mrb[0].mxu0
  %v450 = vadd.f32 %v377, %v449
  %v451 = vpop.f32.mrb[0].mxu0
  %v452 = vadd.f32 %v379, %v451
  %v453 = vpop.f32.mrb[0].mxu0
  %v454 = vadd.f32 %v381, %v453
  %v455 = vpop.f32.mrb[0].mxu0
  %v456 = vadd.f32 %v383, %v455
  %457 = vmatprep.mubr.bf16.mxu0 0
  %458 = vmatmul.mubr.bf16.gmra.mrb[0].mxu0 %v320
  %v459 = vpop.f32.mrb[0].mxu0
  %v460 = vadd.f32 %v387, %v459
  %v461 = vpop.f32.mrb[0].mxu0
  %v462 = vadd.f32 %v389, %v461
  %v463 = vpop.f32.mrb[0].mxu0
  %v464 = vadd.f32 %v391, %v463
  %v465 = vpop.f32.mrb[0].mxu0
  %v466 = vadd.f32 %v393, %v465
  %467 = vdwg.mxu0
  %v468 = vmax.f32 %v430, 0.0
  %v469 = vmax.f32 %v432, 0.0
  %v470 = vmax.f32 %v434, 0.0
  %v471 = vmax.f32 %v436, 0.0
  %v472 = vmax.f32 %v440, 0.0
  %v473 = vmax.f32 %v442, 0.0
  %v474 = vmax.f32 %v444, 0.0
  %v475 = vmax.f32 %v446, 0.0
  %v476 = vmax.f32 %v450, 0.0
  %v477 = vmax.f32 %v452, 0.0
  %v478 = vmax.f32 %v454, 0.0
  %v479 = vmax.f32 %v456, 0.0
  %v480 = vmax.f32 %v460, 0.0
  %v481 = vmax.f32 %v462, 0.0
  %v482 = vmax.f32 %v464, 0.0
  %v483 = vmax.f32 %v466, 0.0
  %v484 = vpack.c.bf16 %v470, %v468
  %v485 = vpack.c.bf16 %v471, %v469
  %v486 = vpack.c.bf16 %v474, %v472
  %v487 = vpack.c.bf16 %v475, %v473
  %v488 = vpack.c.bf16 %v478, %v476
  %v489 = vpack.c.bf16 %v479, %v477
  %v490 = vpack.c.bf16 %v482, %v480
  %v491 = vpack.c.bf16 %v483, %v481
  %v492 = vld [vmem:[%s3] sm:$0xf]
  %v493 = vld [vmem:[%s3 + $0x4] sm:$0xf]
  %v494 = vld [vmem:[%s3 + $0x8] sm:$0xf]
  %v495 = vld [vmem:[%s3 + $0xc] sm:$0xf]
  %v496 = vld [vmem:[%s3 + $0x10] sm:$0xf]
  %v497 = vld [vmem:[%s3 + $0x14] sm:$0xf]
  %v498 = vld [vmem:[%s3 + $0x18] sm:$0xf]
  %v499 = vld [vmem:[%s3 + $0x1c] sm:$0xf]
  %v500 = vld [vmem:[%s3 + $0x20] sm:$0xf]
  %v501 = vld [vmem:[%s3 + $0x24] sm:$0xf]
  %v502 = vld [vmem:[%s3 + $0x28] sm:$0xf]
  %v503 = vld [vmem:[%s3 + $0x2c] sm:$0xf]
  %v504 = vld [vmem:[%s3 + $0x30] sm:$0xf]
  %v505 = vld [vmem:[%s3 + $0x34] sm:$0xf]
  %v506 = vld [vmem:[%s3 + $0x38] sm:$0xf]
  %v507 = vld [vmem:[%s3 + $0x3c] sm:$0xf]
  %v508 = vld [vmem:[%s3 + $0x40] sm:$0xf]
  %v509 = vld [vmem:[%s3 + $0x44] sm:$0xf]
  %v510 = vld [vmem:[%s3 + $0x48] sm:$0xf]
  %v511 = vld [vmem:[%s3 + $0x4c] sm:$0xf]
  %v512 = vld [vmem:[%s4] sm:$0x1]
  %v514 = vlaneseq
  %v515 = vshrl.u32 %v514, 7
  %v516 = vsub.s32 0, %v515
  %v517 = vrot.slane %v512, %v516
  %v539 = vunpack.c.l.b16 %v492
  %v540 = vunpack.c.l.b16 %v493
  %v541 = vunpack.c.l.b16 %v494
  %v542 = vunpack.c.l.b16 %v495
  %v543 = vunpack.c.l.b16 %v496
  %v544 = vunpack.c.l.b16 %v497
  %v545 = vunpack.c.l.b16 %v498
  %v546 = vunpack.c.l.b16 %v499
  %v547 = vunpack.c.l.b16 %v500
  %v548 = vunpack.c.l.b16 %v501
  %v549 = vunpack.c.l.b16 %v502
  %v550 = vunpack.c.l.b16 %v503
  %v551 = vunpack.c.l.b16 %v504
  %v552 = vunpack.c.l.b16 %v505
  %v553 = vunpack.c.l.b16 %v506
  %v554 = vunpack.c.l.b16 %v507
  %v555 = vunpack.c.l.b16 %v508
  %v556 = vunpack.c.l.b16 %v509
  %v557 = vunpack.c.l.b16 %v510
  %v558 = vunpack.c.l.b16 %v511
  %v559 = vpack.c.b16 %v540, %v539
  %v560 = vpack.c.b16 %v542, %v541
  %v561 = vpack.c.b16 %v544, %v543
  %v562 = vpack.c.b16 %v546, %v545
  %v563 = vpack.c.b16 %v548, %v547
  %v564 = vpack.c.b16 %v550, %v549
  %v565 = vpack.c.b16 %v552, %v551
  %v566 = vpack.c.b16 %v554, %v553
  %v567 = vpack.c.b16 %v556, %v555
  %v568 = vpack.c.b16 %v558, %v557
  %vm579 = vcmask 261120
  %v581 = vsel %vm579, %v485, 0
  %v584 = vsel %vm579, %v487, 0
  %v587 = vsel %vm579, %v489, 0
  %v590 = vsel %vm579, %v491, 0
  %592 = vmatprep.subr.bf16.mxu0 0
  %593 = vmatpush1.bf16.msra.mxu0 %v559
  %594 = vmatprep.subr.bf16.mxu0 0
  %595 = vmatpush1.bf16.msra.mxu0 %v560
  %596 = vmatprep.subr.bf16.mxu0 0
  %597 = vmatpush1.bf16.msra.mxu0 %v561
  %598 = vmatprep.subr.bf16.mxu0 0
  %599 = vmatpush1.bf16.msra.mxu0 %v562
  %600 = vmatprep.subr.bf16.mxu0 0
  %601 = vmatpush1.bf16.msra.mxu0 %v563
  %602 = vmatprep.subr.bf16.mxu0 0
  %603 = vmatpush1.bf16.msra.mxu0 %v564
  %604 = vmatprep.subr.bf16.mxu0 0
  %605 = vmatpush1.bf16.msra.mxu0 %v565
  %606 = vmatprep.subr.bf16.mxu0 0
  %607 = vmatpush1.bf16.msra.mxu0 %v566
  %608 = vmatprep.subr.bf16.mxu0 0
  %609 = vmatpush1.bf16.msra.mxu0 %v567
  %610 = vmatprep.subr.bf16.mxu0 0
  %611 = vmatpush1.bf16.msra.mxu0 %v568
  %612 = vmatprep.subr.bf16.mxu0 0
  %613 = vmatpush1.bf16.msra.mxu0 0
  %614 = vmatprep.subr.bf16.mxu0 0
  %615 = vmatpush1.bf16.msra.mxu0 0
  %616 = vmatprep.subr.bf16.mxu0 0
  %617 = vmatpush1.bf16.msra.mxu0 0
  %618 = vmatprep.subr.bf16.mxu0 0
  %619 = vmatpush1.bf16.msra.mxu0 0
  %620 = vmatprep.subr.bf16.mxu0 0
  %621 = vmatpush1.bf16.msra.mxu0 0
  %622 = vmatprep.subr.bf16.mxu0 0
  %623 = vmatpush1.bf16.msra.mxu0 0
  %624 = vmatprep.mubr.bf16.mxu0 %v581
  %625 = vmatmul.mubr.bf16.gmra.mrb[0].mxu0 %v484
  %v626 = vpop.f32.mrb[0].mxu0
  %v627 = vadd.f32 %v517, %v626
  %v628 = vpop.f32.mrb[0].mxu0
  %v629 = vpop.f32.mrb[0].mxu0
  %v630 = vadd.f32 %v517, %v629
  %v631 = vpop.f32.mrb[0].mxu0
  %632 = vmatprep.mubr.bf16.mxu0 %v584
  %633 = vmatmul.mubr.bf16.gmra.mrb[0].mxu0 %v486
  %v634 = vpop.f32.mrb[0].mxu0
  %v635 = vadd.f32 %v517, %v634
  %v636 = vpop.f32.mrb[0].mxu0
  %v637 = vpop.f32.mrb[0].mxu0
  %v638 = vadd.f32 %v517, %v637
  %v639 = vpop.f32.mrb[0].mxu0
  %640 = vmatprep.mubr.bf16.mxu0 %v587
  %641 = vmatmul.mubr.bf16.gmra.mrb[0].mxu0 %v488
  %v642 = vpop.f32.mrb[0].mxu0
  %v643 = vadd.f32 %v517, %v642
  %v644 = vpop.f32.mrb[0].mxu0
  %v645 = vpop.f32.mrb[0].mxu0
  %v646 = vadd.f32 %v517, %v645
  %v647 = vpop.f32.mrb[0].mxu0
  %648 = vmatprep.mubr.bf16.mxu0 %v590
  %649 = vmatmul.mubr.bf16.gmra.mrb[0].mxu0 %v490
  %v650 = vpop.f32.mrb[0].mxu0
  %v651 = vadd.f32 %v517, %v650
  %v652 = vpop.f32.mrb[0].mxu0
  %v653 = vpop.f32.mrb[0].mxu0
  %v654 = vadd.f32 %v517, %v653
  %v655 = vpop.f32.mrb[0].mxu0
  %656 = vdwg.mxu0
  %v657 = vxor.u32 %v627, 2147483648
  %v658 = vxor.u32 %v630, 2147483648
  %v659 = vxor.u32 %v635, 2147483648
  %v660 = vxor.u32 %v638, 2147483648
  %v661 = vxor.u32 %v643, 2147483648
  %v662 = vxor.u32 %v646, 2147483648
  %v663 = vxor.u32 %v651, 2147483648
  %v664 = vxor.u32 %v654, 2147483648
  %v665 = vmul.f32 %v657, 1.442695
  %v666 = vpow.pop %v665
  %v667 = vmul.f32 %v658, 1.442695
  %v668 = vpow.pop %v667
  %v669 = vmul.f32 %v659, 1.442695
  %v670 = vpow.pop %v669
  %v671 = vmul.f32 %v660, 1.442695
  %v672 = vpow.pop %v671
  %v673 = vmul.f32 %v661, 1.442695
  %v674 = vpow.pop %v673
  %v675 = vmul.f32 %v662, 1.442695
  %v676 = vpow.pop %v675
  %v677 = vmul.f32 %v663, 1.442695
  %v678 = vpow.pop %v677
  %v679 = vmul.f32 %v664, 1.442695
  %v680 = vpow.pop %v679
  %v681 = vadd.f32 %v666, 1.0
  %v682 = vadd.f32 %v668, 1.0
  %v683 = vadd.f32 %v670, 1.0
  %v684 = vadd.f32 %v672, 1.0
  %v685 = vadd.f32 %v674, 1.0
  %v686 = vadd.f32 %v676, 1.0
  %v687 = vadd.f32 %v678, 1.0
  %v688 = vadd.f32 %v680, 1.0
  %v689 = vrcp.pop %v681
  %v690 = vmul.f32 1.0, %v689
  %v691 = vrcp.pop %v682
  %v692 = vmul.f32 1.0, %v691
  %v693 = vrcp.pop %v683
  %v694 = vmul.f32 1.0, %v693
  %v695 = vrcp.pop %v684
  %v696 = vmul.f32 1.0, %v695
  %v697 = vrcp.pop %v685
  %v698 = vmul.f32 1.0, %v697
  %v699 = vrcp.pop %v686
  %v700 = vmul.f32 1.0, %v699
  %v701 = vrcp.pop %v687
  %v702 = vmul.f32 1.0, %v701
  %v703 = vrcp.pop %v688
  %v704 = vmul.f32 1.0, %v703
  %v705 = vpack.c.bf16 %v692, %v690
  %v706 = vpack.c.bf16 %v696, %v694
  %v707 = vpack.c.bf16 %v700, %v698
  %v708 = vpack.c.bf16 %v704, %v702
  %v713 = vunpack.c.l.b16 %v705
  %v714 = vunpack.c.h.b16 %v705
  %v715 = vunpack.c.l.b16 %v706
  %v716 = vunpack.c.h.b16 %v706
  %v717 = vunpack.c.l.b16 %v707
  %v718 = vunpack.c.h.b16 %v707
  %v719 = vunpack.c.l.b16 %v708
  %v720 = vunpack.c.h.b16 %v708
  %v721 = vpack.c.b16 %v713, %v713
  %v722 = vpack.c.b16 %v714, %v714
  %v723 = vpack.c.b16 %v715, %v715
  %v724 = vpack.c.b16 %v716, %v716
  %v725 = vpack.c.b16 %v717, %v717
  %v726 = vpack.c.b16 %v718, %v718
  %v727 = vpack.c.b16 %v719, %v719
  %v728 = vpack.c.b16 %v720, %v720
  %737 = vst [vmem:[%s5] sm:$0xf] %v721
  %738 = vst [vmem:[%s5 + $0x4] sm:$0xf] %v722
  %739 = vst [vmem:[%s5 + $0x8] sm:$0xf] %v723
  %740 = vst [vmem:[%s5 + $0xc] sm:$0xf] %v724
  %741 = vst [vmem:[%s5 + $0x10] sm:$0xf] %v725
  %742 = vst [vmem:[%s5 + $0x14] sm:$0xf] %v726
  %743 = vst [vmem:[%s5 + $0x18] sm:$0xf] %v727
  %744 = vst [vmem:[%s5 + $0x1c] sm:$0xf] %v728
  // Predicated region
  $region22: #{_mlp_forward.1} parent=0 // pred_check
    _
  $region23: #{_mlp_forward.1} parent=0 // pred_check_branch
    %746 = sbr.rel (0) target = $region25
  $region24: #{_mlp_forward.1} parent=0 // pred_region
    _
  $region25: #{_mlp_forward.1} parent=0 // pred_fallthru
    _
  // Predicated region
  $region26: #{_mlp_forward.1} parent=0 // pred_check
    _
  $region27: #{_mlp_forward.1} parent=0 // pred_check_branch
    %748 = sbr.rel (0) target = $region29
  $region28: #{_mlp_forward.1} parent=0 // pred_region
    _
  $region29: #{_mlp_forward.1} parent=0 // pred_fallthru
    _

</llo_original>
